<compile_context>
chip_gen: v6e
topology: v6e:2x2x1
jax: 0.10.0
libtpu: 0.0.40
codegen_flags: <defaults>
</compile_context>

<pallas_src>
import numpy as np
import jax
import jax.numpy as jnp
from jax import lax
from jax.experimental import pallas as pl
from jax.experimental.pallas import tpu as pltpu


def _round_up(x, m):
    return (x + m - 1) // m * m


# --------------------------- graphnorm: pass 1 -------------------------------
def _graphnorm_stats_kernel(first_ref, last_ref,            # SMEM (prefetch)
                            x_ref, seg_ref, invc_ref, w_ref, b_ref, ms_ref,
                            scale_ref, shift_ref):          # [B_pad, H] outputs
    t = pl.program_id(0)
    n_tiles = pl.num_programs(0)
    g_lo = first_ref[t]                  # first graph id touching this tile
    g_hi = last_ref[t] + 1               # one past last graph id in this tile

    b_pad, h = scale_ref.shape
    b_iota = lax.broadcasted_iota(jnp.int32, (b_pad, h), 0)

    x = x_ref[...].astype(jnp.float32)   # [TILE, H]
    seg = seg_ref[...]                   # [TILE, 1] int32 graph ids

    @pl.when(t == 0)
    def _init():
        scale_ref[...] = jnp.zeros_like(scale_ref)   # holds sum(x)   for now
        shift_ref[...] = jnp.zeros_like(shift_ref)   # holds sum(x^2) for now

    # Loop only over the graphs overlapping this tile (contiguous segments).
    def body(g, carry):
        s_acc, q_acc = carry
        xg = jnp.where(seg == g, x, 0.0)                    # [TILE, H]
        s = jnp.sum(xg, axis=0, keepdims=True)              # [1, H]
        q = jnp.sum(xg * xg, axis=0, keepdims=True)         # [1, H]
        row = b_iota == g                                   # [B_pad, H]
        return (s_acc + jnp.where(row, s, 0.0),
                q_acc + jnp.where(row, q, 0.0))

    zeros = jnp.zeros((b_pad, h), jnp.float32)
    s_acc, q_acc = lax.fori_loop(g_lo, g_hi, body, (zeros, zeros))
    scale_ref[...] = scale_ref[...] + s_acc
    shift_ref[...] = shift_ref[...] + q_acc

    @pl.when(t == n_tiles - 1)
    def _finalize():
        # Turn raw (sum, sum_sq) into per-graph (scale, shift):
        #   out = x * scale[g] + shift[g]  ==  w * (x - ms*mean) / std + b
        inv_n = invc_ref[...]                                # [B_pad, 1]
        ms = ms_ref[...]                                     # [1, H]
        mean = scale_ref[...] * inv_n                        # [B_pad, H]
        # E[(x - ms*mean)^2] = E[x^2] - mean^2 * (2*ms - ms^2)
        var = shift_ref[...] * inv_n - mean * mean * (2.0 * ms - ms * ms)
        var = jnp.maximum(var, 0.0)
        scale = w_ref[...] * lax.rsqrt(var + 1e-6)           # [B_pad, H]
        shift = b_ref[...] - ms * mean * scale               # [B_pad, H]
        scale_ref[...] = scale
        shift_ref[...] = shift


# --------------------------- graphnorm: pass 2 -------------------------------
def _graphnorm_apply_kernel(first_ref, last_ref,             # SMEM (prefetch)
                            x_ref, seg_ref, scale_ref, shift_ref,
                            o_ref):
    t = pl.program_id(0)
    g_lo = first_ref[t]
    g_hi = last_ref[t] + 1

    b_pad, h = scale_ref.shape
    b_iota = lax.broadcasted_iota(jnp.int32, (b_pad, h), 0)

    x = x_ref[...].astype(jnp.float32)       # [TILE, H]
    seg = seg_ref[...]                       # [TILE, 1]
    scale_tbl = scale_ref[...]               # [B_pad, H]  (hoisted loads)
    shift_tbl = shift_ref[...]               # [B_pad, H]

    def body(g, acc):
        row = b_iota == g
        sc = jnp.sum(jnp.where(row, scale_tbl, 0.0), axis=0, keepdims=True)
        sh = jnp.sum(jnp.where(row, shift_tbl, 0.0), axis=0, keepdims=True)
        return jnp.where(seg == g, x * sc + sh, acc)

    out = lax.fori_loop(g_lo, g_hi, body, jnp.zeros_like(x))
    o_ref[...] = out.astype(o_ref.dtype)


def graphnorm(x, batch_num_nodes, weight, bias, mean_scale):
    N, H = x.shape
    counts = np.asarray(batch_num_nodes, dtype=np.int64)
    B = counts.shape[0]

    tile = min(256, _round_up(N, 8))          # node-tile rows (multiple of 8)
    n_pad = _round_up(N, tile)
    n_tiles = n_pad // tile
    b_pad = _round_up(B + 1, 8)               # +1 sentinel graph for padding

    # O(N) host-side int metadata only (no [B, N] matrices).
    seg = np.full((n_pad,), B, dtype=np.int32)        # padded rows -> sentinel
    seg[:N] = np.repeat(np.arange(B, dtype=np.int32), counts)
    tile_starts = np.arange(n_tiles) * tile
    first_g = seg[tile_starts].astype(np.int32)
    last_g = seg[tile_starts + tile - 1].astype(np.int32)

    inv_cnt = np.zeros((b_pad, 1), np.float32)
    inv_cnt[:B, 0] = np.where(counts > 0,
                              1.0 / np.maximum(counts, 1).astype(np.float32),
                              0.0)

    x_pad = jnp.pad(x, ((0, n_pad - N), (0, 0))) if n_pad != N else x
    seg_dev = jnp.asarray(seg).reshape(n_pad, 1)
    first_dev = jnp.asarray(first_g)
    last_dev = jnp.asarray(last_g)

    # ----- pass 1: per-graph (scale, shift) tables -----
    scale_tbl, shift_tbl = pl.pallas_call(
        _graphnorm_stats_kernel,
        out_shape=(jax.ShapeDtypeStruct((b_pad, H), jnp.float32),
                   jax.ShapeDtypeStruct((b_pad, H), jnp.float32)),
        grid_spec=pltpu.PrefetchScalarGridSpec(
            num_scalar_prefetch=2,
            grid=(n_tiles,),
            in_specs=[
                pl.BlockSpec((tile, H), lambda t, fg, lg: (t, 0)),    # x
                pl.BlockSpec((tile, 1), lambda t, fg, lg: (t, 0)),    # seg ids
                pl.BlockSpec((b_pad, 1), lambda t, fg, lg: (0, 0)),   # 1/count
                pl.BlockSpec((1, H), lambda t, fg, lg: (0, 0)),       # weight
                pl.BlockSpec((1, H), lambda t, fg, lg: (0, 0)),       # bias
                pl.BlockSpec((1, H), lambda t, fg, lg: (0, 0)),       # mean_scale
            ],
            out_specs=[pl.BlockSpec((b_pad, H), lambda t, fg, lg: (0, 0)),
                       pl.BlockSpec((b_pad, H), lambda t, fg, lg: (0, 0))],
        ),
        compiler_params=pltpu.CompilerParams(
            dimension_semantics=("arbitrary",),       # tables are accumulated
            vmem_limit_bytes=32 * 1024 * 1024),
    )(first_dev, last_dev,
      x_pad, seg_dev, jnp.asarray(inv_cnt),
      weight.reshape(1, H), bias.reshape(1, H), mean_scale.reshape(1, H))

    # ----- pass 2: normalize each node tile (independent -> parallel) -----
    out = pl.pallas_call(
        _graphnorm_apply_kernel,
        out_shape=jax.ShapeDtypeStruct((n_pad, H), x.dtype),
        grid_spec=pltpu.PrefetchScalarGridSpec(
            num_scalar_prefetch=2,
            grid=(n_tiles,),
            in_specs=[
                pl.BlockSpec((tile, H), lambda t, fg, lg: (t, 0)),    # x
                pl.BlockSpec((tile, 1), lambda t, fg, lg: (t, 0)),    # seg ids
                pl.BlockSpec((b_pad, H), lambda t, fg, lg: (0, 0)),   # scale
                pl.BlockSpec((b_pad, H), lambda t, fg, lg: (0, 0)),   # shift
            ],
            out_specs=pl.BlockSpec((tile, H), lambda t, fg, lg: (t, 0)),
        ),
        compiler_params=pltpu.CompilerParams(
            dimension_semantics=("parallel",),
            vmem_limit_bytes=32 * 1024 * 1024),
    )(first_dev, last_dev, x_pad, seg_dev, scale_tbl, shift_tbl)

    return out[:N] if n_pad != N else out


# ----------------------------- layernorm kernel ------------------------------
def _layernorm_kernel(x_ref, w_ref, b_ref, o_ref):
    x = x_ref[...].astype(jnp.float32)
    mu = jnp.mean(x, axis=-1, keepdims=True)
    xc = x - mu
    var = jnp.mean(xc * xc, axis=-1, keepdims=True)
    y = xc * lax.rsqrt(var + 1e-5)
    o_ref[...] = (y * w_ref[...] + b_ref[...]).astype(o_ref.dtype)


def layernorm(x, weight, bias):
    N, H = x.shape
    tile = min(512, _round_up(N, 8))
    n_pad = _round_up(N, tile)
    x_pad = jnp.pad(x, ((0, n_pad - N), (0, 0))) if n_pad != N else x

    out = pl.pallas_call(
        _layernorm_kernel,
        out_shape=jax.ShapeDtypeStruct((n_pad, H), x.dtype),
        grid=(n_pad // tile,),
        in_specs=[pl.BlockSpec((tile, H), lambda i: (i, 0)),
                  pl.BlockSpec((1, H), lambda i: (0, 0)),
                  pl.BlockSpec((1, H), lambda i: (0, 0))],
        out_specs=pl.BlockSpec((tile, H), lambda i: (i, 0)),
        compiler_params=pltpu.CompilerParams(
            dimension_semantics=("parallel",),
            vmem_limit_bytes=32 * 1024 * 1024),
    )(x_pad, weight.reshape(1, H), bias.reshape(1, H))

    return out[:N] if n_pad != N else out


# ------------------------------- module glue ---------------------------------
class Graph:
    def __init__(self, batch_num_nodes):
        self.batch_num_nodes = batch_num_nodes


class NormLayer:
    """JAX/Pallas port of RobustGAE NormLayer forward."""
    # TODO(synk): 'batchnorm' branch delegates to nn.BatchNorm1d (stateful
    # running statistics) in the reference; not reproduced here.

    def __init__(self, hidden_dim, norm_type):
        self.norm_type = norm_type
        if norm_type == 'layernorm':
            self.weight = jnp.ones((hidden_dim,), jnp.float32)
            self.bias = jnp.zeros((hidden_dim,), jnp.float32)
        elif norm_type == 'graphnorm':
            self.weight = jnp.ones((hidden_dim,), jnp.float32)
            self.bias = jnp.zeros((hidden_dim,), jnp.float32)
            self.mean_scale = jnp.ones((hidden_dim,), jnp.float32)
        else:
            raise NotImplementedError

    def __call__(self, graph, x):
        if self.norm_type == 'layernorm':
            return layernorm(x, self.weight, self.bias)
        return graphnorm(x, graph.batch_num_nodes, self.weight, self.bias,
                         self.mean_scale)


# ------------------------------ reference check ------------------------------
def _graphnorm_ref(x, counts, weight, bias, mean_scale):
    x = np.asarray(x, np.float32)
    counts = np.asarray(counts, np.int64)
    seg = np.repeat(np.arange(len(counts)), counts)
    B, H = len(counts), x.shape[1]
    mean = np.zeros((B, H), np.float32)
    np.add.at(mean, seg, x)
    mean = mean / counts[:, None]
    sub = x - mean[seg] * np.asarray(mean_scale)
    std = np.zeros((B, H), np.float32)
    np.add.at(std, seg, sub ** 2)
    std = np.sqrt(std / counts[:, None] + 1e-6)
    return np.asarray(weight) * sub / std[seg] + np.asarray(bias)


if __name__ == "__main__":
    hidden = 32
    batch_num_nodes = [5, 4, 3]          # 3 graphs, 12 nodes total
    N = sum(batch_num_nodes)

    key = jax.random.PRNGKey(0)
    x = jax.random.normal(key, (N, hidden), dtype=jnp.float32)

    # --- graphnorm branch ---
    layer = NormLayer(hidden, 'graphnorm')
    graph = Graph(batch_num_nodes)
    out = jax.block_until_ready(layer(graph, x))

    ref = _graphnorm_ref(np.asarray(x), batch_num_nodes,
                         np.asarray(layer.weight), np.asarray(layer.bias),
                         np.asarray(layer.mean_scale))
    np.testing.assert_allclose(np.asarray(out), ref, rtol=1e-4, atol=1e-4)

    # --- layernorm branch ---
    ln = NormLayer(hidden, 'layernorm')
    ln_out = jax.block_until_ready(ln(graph, x))
    xf = np.asarray(x, np.float32)
    mu = xf.mean(-1, keepdims=True)
    var = ((xf - mu) ** 2).mean(-1, keepdims=True)
    ln_ref = (xf - mu) / np.sqrt(var + 1e-5)
    np.testing.assert_allclose(np.asarray(ln_out), ln_ref, rtol=1e-4, atol=1e-4)

    print("KERNEL_OK")
</pallas_src>

<mosaic_0001>
module attributes {stable_mosaic.version = 11 : i64} {
  func.func @_graphnorm_stats_kernel(%arg0: i32, %arg1: memref<1xi32, #tpu.memory_space<smem>>, %arg2: memref<1xi32, #tpu.memory_space<smem>>, %arg3: memref<16x32xf32, #tpu.memory_space<vmem>>, %arg4: memref<16x1xi32, #tpu.memory_space<vmem>>, %arg5: memref<8x1xf32, #tpu.memory_space<vmem>>, %arg6: memref<1x32xf32, #tpu.memory_space<vmem>>, %arg7: memref<1x32xf32, #tpu.memory_space<vmem>>, %arg8: memref<1x32xf32, #tpu.memory_space<vmem>>, %arg9: memref<8x32xf32, #tpu.memory_space<vmem>>, %arg10: memref<8x32xf32, #tpu.memory_space<vmem>>) attributes {dimension_semantics = [#tpu.dimension_semantics<arbitrary>], iteration_bounds = array<i64: 1>, scalar_prefetch = 2 : i64, scratch_operands = 0 : i64, tpu.core_type = #tpu.core_type<tc>, window_params = [{transform_indices = @transform_0, window_bounds = array<i64: 16, 32>}, {transform_indices = @transform_1, window_bounds = array<i64: 16, 1>}, {pipeline_mode = #tpu.pipeline_mode<synchronous>, transform_indices = @transform_2, window_bounds = array<i64: 8, 1>}, {pipeline_mode = #tpu.pipeline_mode<synchronous>, transform_indices = @transform_3, window_bounds = array<i64: 1, 32>}, {pipeline_mode = #tpu.pipeline_mode<synchronous>, transform_indices = @transform_4, window_bounds = array<i64: 1, 32>}, {pipeline_mode = #tpu.pipeline_mode<synchronous>, transform_indices = @transform_5, window_bounds = array<i64: 1, 32>}, {pipeline_mode = #tpu.pipeline_mode<synchronous>, transform_indices = @transform_6, window_bounds = array<i64: 8, 32>}, {pipeline_mode = #tpu.pipeline_mode<synchronous>, transform_indices = @transform_7, window_bounds = array<i64: 8, 32>}]} {
    %0 = arith.index_cast %arg0 : i32 to index
    %1 = memref.load %arg1[%0] : memref<1xi32, #tpu.memory_space<smem>>
    %2 = arith.index_cast %arg0 : i32 to index
    %3 = memref.load %arg2[%2] : memref<1xi32, #tpu.memory_space<smem>>
    %c1_i32 = arith.constant 1 : i32
    %4 = arith.addi %3, %c1_i32 : i32
    %5 = tpu.iota {dimensions = array<i32: 0>} : vector<8x32xi32>
    %c0 = arith.constant 0 : index
    %c0_0 = arith.constant 0 : index
    %6 = vector.load %arg3[%c0, %c0_0] : memref<16x32xf32, #tpu.memory_space<vmem>>, vector<16x32xf32>
    %c0_1 = arith.constant 0 : index
    %c0_2 = arith.constant 0 : index
    %7 = vector.load %arg4[%c0_1, %c0_2] : memref<16x1xi32, #tpu.memory_space<vmem>>, vector<16x1xi32>
    %c0_i32 = arith.constant 0 : i32
    %8 = arith.cmpi eq, %arg0, %c0_i32 : i32
    %9 = arith.extui %8 : i1 to i32
    %c0_i32_3 = arith.constant 0 : i32
    %10 = arith.cmpi ne, %9, %c0_i32_3 : i32
    scf.if %10 {
      %cst_15 = arith.constant 0.000000e+00 : f32
      %24 = vector.broadcast %cst_15 : f32 to vector<8x32xf32>
      %c0_16 = arith.constant 0 : index
      %c0_17 = arith.constant 0 : index
      %25 = vector.load %arg9[%c0_16, %c0_17] : memref<8x32xf32, #tpu.memory_space<vmem>>, vector<8x32xf32>
      tpu.vector_store %arg9[%c0_16, %c0_17], %24 {strides = array<i32>} : memref<8x32xf32, #tpu.memory_space<vmem>>, vector<8x32xf32>,
      %cst_18 = arith.constant 0.000000e+00 : f32
      %26 = vector.broadcast %cst_18 : f32 to vector<8x32xf32>
      %c0_19 = arith.constant 0 : index
      %c0_20 = arith.constant 0 : index
      %27 = vector.load %arg10[%c0_19, %c0_20] : memref<8x32xf32, #tpu.memory_space<vmem>>, vector<8x32xf32>
      tpu.vector_store %arg10[%c0_19, %c0_20], %26 {strides = array<i32>} : memref<8x32xf32, #tpu.memory_space<vmem>>, vector<8x32xf32>,
    } else {
    }
    %cst = arith.constant 0.000000e+00 : f32
    %11 = vector.broadcast %cst : f32 to vector<8x32xf32>
    %12 = arith.subi %4, %1 : i32
    %13 = arith.addi %1, %12 : i32
    %c1_i32_4 = arith.constant 1 : i32
    %14:2 = scf.for %arg11 = %1 to %13 step %c1_i32_4 iter_args(%arg12 = %11, %arg13 = %11) -> (vector<8x32xf32>, vector<8x32xf32>)  : i32 {
      %24 = vector.broadcast %arg11 : i32 to vector<16x1xi32>
      %25 = arith.cmpi eq, %7, %24 : vector<16x1xi32>
      %cst_15 = arith.constant 0.000000e+00 : f32
      %26 = vector.shape_cast %25 : vector<16x1xi1> to vector<16x1xi1>
      %27 = vector.broadcast %26 : vector<16x1xi1> to vector<16x32xi1>
      %28 = vector.broadcast %cst_15 : f32 to vector<16x32xf32>
      %29 = arith.select %27, %6, %28 : vector<16x32xi1>, vector<16x32xf32>
      %cst_16 = arith.constant dense<0.000000e+00> : vector<32xf32>
      %30 = vector.multi_reduction <add>, %29, %cst_16 [0] : vector<16x32xf32> to vector<32xf32>
      %31 = vector.shape_cast %30 : vector<32xf32> to vector<1x32xf32>
      %32 = arith.mulf %29, %29 : vector<16x32xf32>
      %cst_17 = arith.constant dense<0.000000e+00> : vector<32xf32>
      %33 = vector.multi_reduction <add>, %32, %cst_17 [0] : vector<16x32xf32> to vector<32xf32>
      %34 = vector.shape_cast %33 : vector<32xf32> to vector<1x32xf32>
      %35 = vector.broadcast %arg11 : i32 to vector<8x32xi32>
      %36 = arith.cmpi eq, %5, %35 : vector<8x32xi32>
      %cst_18 = arith.constant 0.000000e+00 : f32
      %37 = vector.shape_cast %31 : vector<1x32xf32> to vector<1x32xf32>
      %38 = vector.broadcast %37 : vector<1x32xf32> to vector<8x32xf32>
      %39 = vector.broadcast %cst_18 : f32 to vector<8x32xf32>
      %40 = arith.select %36, %38, %39 : vector<8x32xi1>, vector<8x32xf32>
      %41 = arith.addf %arg12, %40 : vector<8x32xf32>
      %cst_19 = arith.constant 0.000000e+00 : f32
      %42 = vector.shape_cast %34 : vector<1x32xf32> to vector<1x32xf32>
      %43 = vector.broadcast %42 : vector<1x32xf32> to vector<8x32xf32>
      %44 = vector.broadcast %cst_19 : f32 to vector<8x32xf32>
      %45 = arith.select %36, %43, %44 : vector<8x32xi1>, vector<8x32xf32>
      %46 = arith.addf %arg13, %45 : vector<8x32xf32>
      scf.yield %41, %46 : vector<8x32xf32>, vector<8x32xf32>
    }
    %c0_5 = arith.constant 0 : index
    %c0_6 = arith.constant 0 : index
    %15 = vector.load %arg9[%c0_5, %c0_6] : memref<8x32xf32, #tpu.memory_space<vmem>>, vector<8x32xf32>
    %16 = arith.addf %15, %14#0 : vector<8x32xf32>
    %c0_7 = arith.constant 0 : index
    %c0_8 = arith.constant 0 : index
    %17 = vector.load %arg9[%c0_7, %c0_8] : memref<8x32xf32, #tpu.memory_space<vmem>>, vector<8x32xf32>
    tpu.vector_store %arg9[%c0_7, %c0_8], %16 {strides = array<i32>} : memref<8x32xf32, #tpu.memory_space<vmem>>, vector<8x32xf32>,
    %c0_9 = arith.constant 0 : index
    %c0_10 = arith.constant 0 : index
    %18 = vector.load %arg10[%c0_9, %c0_10] : memref<8x32xf32, #tpu.memory_space<vmem>>, vector<8x32xf32>
    %19 = arith.addf %18, %14#1 : vector<8x32xf32>
    %c0_11 = arith.constant 0 : index
    %c0_12 = arith.constant 0 : index
    %20 = vector.load %arg10[%c0_11, %c0_12] : memref<8x32xf32, #tpu.memory_space<vmem>>, vector<8x32xf32>
    tpu.vector_store %arg10[%c0_11, %c0_12], %19 {strides = array<i32>} : memref<8x32xf32, #tpu.memory_space<vmem>>, vector<8x32xf32>,
    %c0_i32_13 = arith.constant 0 : i32
    %21 = arith.cmpi eq, %arg0, %c0_i32_13 : i32
    %22 = arith.extui %21 : i1 to i32
    %c0_i32_14 = arith.constant 0 : i32
    %23 = arith.cmpi ne, %22, %c0_i32_14 : i32
    scf.if %23 {
      %c0_15 = arith.constant 0 : index
      %c0_16 = arith.constant 0 : index
      %24 = vector.load %arg5[%c0_15, %c0_16] : memref<8x1xf32, #tpu.memory_space<vmem>>, vector<8x1xf32>
      %c0_17 = arith.constant 0 : index
      %c0_18 = arith.constant 0 : index
      %25 = vector.load %arg8[%c0_17, %c0_18] : memref<1x32xf32, #tpu.memory_space<vmem>>, vector<1x32xf32>
      %c0_19 = arith.constant 0 : index
      %c0_20 = arith.constant 0 : index
      %26 = vector.load %arg9[%c0_19, %c0_20] : memref<8x32xf32, #tpu.memory_space<vmem>>, vector<8x32xf32>
      %27 = vector.broadcast %24 : vector<8x1xf32> to vector<8x32xf32>
      %28 = arith.mulf %26, %27 : vector<8x32xf32>
      %c0_21 = arith.constant 0 : index
      %c0_22 = arith.constant 0 : index
      %29 = vector.load %arg10[%c0_21, %c0_22] : memref<8x32xf32, #tpu.memory_space<vmem>>, vector<8x32xf32>
      %30 = vector.broadcast %24 : vector<8x1xf32> to vector<8x32xf32>
      %31 = arith.mulf %29, %30 : vector<8x32xf32>
      %32 = arith.mulf %28, %28 : vector<8x32xf32>
      %cst_23 = arith.constant 2.000000e+00 : f32
      %33 = vector.broadcast %cst_23 : f32 to vector<1x32xf32>
      %34 = arith.mulf %33, %25 : vector<1x32xf32>
      %35 = arith.mulf %25, %25 : vector<1x32xf32>
      %36 = arith.subf %34, %35 : vector<1x32xf32>
      %37 = vector.broadcast %36 : vector<1x32xf32> to vector<8x32xf32>
      %38 = arith.mulf %32, %37 : vector<8x32xf32>
      %39 = arith.subf %31, %38 : vector<8x32xf32>
      %cst_24 = arith.constant 0.000000e+00 : f32
      %40 = vector.broadcast %cst_24 : f32 to vector<8x32xf32>
      %41 = arith.maximumf %39, %40 : vector<8x32xf32>
      %c0_25 = arith.constant 0 : index
      %c0_26 = arith.constant 0 : index
      %42 = vector.load %arg6[%c0_25, %c0_26] : memref<1x32xf32, #tpu.memory_space<vmem>>, vector<1x32xf32>
      %cst_27 = arith.constant 9.99999997E-7 : f32
      %43 = vector.broadcast %cst_27 : f32 to vector<8x32xf32>
      %44 = arith.addf %41, %43 : vector<8x32xf32>
      %45 = math.rsqrt %44 : vector<8x32xf32>
      %46 = vector.broadcast %42 : vector<1x32xf32> to vector<8x32xf32>
      %47 = arith.mulf %46, %45 : vector<8x32xf32>
      %c0_28 = arith.constant 0 : index
      %c0_29 = arith.constant 0 : index
      %48 = vector.load %arg7[%c0_28, %c0_29] : memref<1x32xf32, #tpu.memory_space<vmem>>, vector<1x32xf32>
      %49 = vector.broadcast %25 : vector<1x32xf32> to vector<8x32xf32>
      %50 = arith.mulf %49, %28 : vector<8x32xf32>
      %51 = arith.mulf %50, %47 : vector<8x32xf32>
      %52 = vector.broadcast %48 : vector<1x32xf32> to vector<8x32xf32>
      %53 = arith.subf %52, %51 : vector<8x32xf32>
      %c0_30 = arith.constant 0 : index
      %c0_31 = arith.constant 0 : index
      %54 = vector.load %arg9[%c0_30, %c0_31] : memref<8x32xf32, #tpu.memory_space<vmem>>, vector<8x32xf32>
      tpu.vector_store %arg9[%c0_30, %c0_31], %47 {strides = array<i32>} : memref<8x32xf32, #tpu.memory_space<vmem>>, vector<8x32xf32>,
      %c0_32 = arith.constant 0 : index
      %c0_33 = arith.constant 0 : index
      %55 = vector.load %arg10[%c0_32, %c0_33] : memref<8x32xf32, #tpu.memory_space<vmem>>, vector<8x32xf32>
      tpu.vector_store %arg10[%c0_32, %c0_33], %53 {strides = array<i32>} : memref<8x32xf32, #tpu.memory_space<vmem>>, vector<8x32xf32>,
    } else {
    }
    return
  }
  func.func @transform_0(%arg0: i32, %arg1: memref<1xi32, #tpu.memory_space<smem>>, %arg2: memref<1xi32, #tpu.memory_space<smem>>) -> (i32, i32) {
    %c0_i32 = arith.constant 0 : i32
    %c0_i32_0 = arith.constant 0 : i32
    return %arg0, %c0_i32 : i32, i32
  }
  func.func @transform_1(%arg0: i32, %arg1: memref<1xi32, #tpu.memory_space<smem>>, %arg2: memref<1xi32, #tpu.memory_space<smem>>) -> (i32, i32) {
    %c0_i32 = arith.constant 0 : i32
    %c0_i32_0 = arith.constant 0 : i32
    return %arg0, %c0_i32 : i32, i32
  }
  func.func @transform_2(%arg0: i32, %arg1: memref<1xi32, #tpu.memory_space<smem>>, %arg2: memref<1xi32, #tpu.memory_space<smem>>) -> (i32, i32) {
    %c0_i32 = arith.constant 0 : i32
    %c0_i32_0 = arith.constant 0 : i32
    %c0_i32_1 = arith.constant 0 : i32
    return %c0_i32, %c0_i32_0 : i32, i32
  }
  func.func @transform_3(%arg0: i32, %arg1: memref<1xi32, #tpu.memory_space<smem>>, %arg2: memref<1xi32, #tpu.memory_space<smem>>) -> (i32, i32) {
    %c0_i32 = arith.constant 0 : i32
    %c0_i32_0 = arith.constant 0 : i32
    %c0_i32_1 = arith.constant 0 : i32
    return %c0_i32, %c0_i32_0 : i32, i32
  }
  func.func @transform_4(%arg0: i32, %arg1: memref<1xi32, #tpu.memory_space<smem>>, %arg2: memref<1xi32, #tpu.memory_space<smem>>) -> (i32, i32) {
    %c0_i32 = arith.constant 0 : i32
    %c0_i32_0 = arith.constant 0 : i32
    %c0_i32_1 = arith.constant 0 : i32
    return %c0_i32, %c0_i32_0 : i32, i32
  }
  func.func @transform_5(%arg0: i32, %arg1: memref<1xi32, #tpu.memory_space<smem>>, %arg2: memref<1xi32, #tpu.memory_space<smem>>) -> (i32, i32) {
    %c0_i32 = arith.constant 0 : i32
    %c0_i32_0 = arith.constant 0 : i32
    %c0_i32_1 = arith.constant 0 : i32
    return %c0_i32, %c0_i32_0 : i32, i32
  }
  func.func @transform_6(%arg0: i32, %arg1: memref<1xi32, #tpu.memory_space<smem>>, %arg2: memref<1xi32, #tpu.memory_space<smem>>) -> (i32, i32) {
    %c0_i32 = arith.constant 0 : i32
    %c0_i32_0 = arith.constant 0 : i32
    %c0_i32_1 = arith.constant 0 : i32
    return %c0_i32, %c0_i32_0 : i32, i32
  }
  func.func @transform_7(%arg0: i32, %arg1: memref<1xi32, #tpu.memory_space<smem>>, %arg2: memref<1xi32, #tpu.memory_space<smem>>) -> (i32, i32) {
    %c0_i32 = arith.constant 0 : i32
    %c0_i32_0 = arith.constant 0 : i32
    %c0_i32_1 = arith.constant 0 : i32
    return %c0_i32, %c0_i32_0 : i32, i32
  }
}

</mosaic_0001>

<llo_original>
// kernel: tpu_custom_call.1
$region0: #{tpu_custom_call.1}
  #allocation0 [shape = 'u32[]', space=smem, size = 0x4, offset = 0x4, fixed_abs, tag = 'smem constant byte address 0x4 - core index']
  #allocation1 [shape = 'u32[144,128]{1,0:T(1,128)}', space=vmem, size = 0x12000, scoped, tag = 'internal scratch']
  #allocation2 [shape = 's32[1]{0}', space=sflag, size = 0x4, scoped, tag = 'scoped memory for tpu_custom_call.1']
  #allocation3 [shape = 's32[1]{0:T(128)S(6)}', space=smem, size = 0x200, scoped, tag = 'prefetched SMEM operand 0']
  #allocation4 [shape = 's32[1]{0:T(128)S(6)}', space=smem, size = 0x200, scoped, tag = 'prefetched SMEM operand 1']
  %s0 = inlined_call_operand.<no memory space> [shape: s32[1], index: 0, kind: input, shape index: {}]
  %s1 = inlined_call_operand.<no memory space> [shape: s32[1], index: 1, kind: input, shape index: {}]
  %s2 = inlined_call_operand.vmem [shape: f32[16,32], index: 2, kind: input, shape index: {}]
  %s3 = inlined_call_operand.vmem [shape: s32[16,1], index: 3, kind: input, shape index: {}]
  %s4 = inlined_call_operand.vmem [shape: f32[8,1], index: 4, kind: input, shape index: {}]
  %s5 = inlined_call_operand.vmem [shape: f32[1,32], index: 5, kind: input, shape index: {}]
  %s6 = inlined_call_operand.vmem [shape: f32[1,32], index: 6, kind: input, shape index: {}]
  %s7 = inlined_call_operand.vmem [shape: f32[1,32], index: 7, kind: input, shape index: {}]
  %s8 = inlined_call_operand.hbm [shape: f32[8,32], index: 8, kind: output, shape index: {0}]
  %s9 = inlined_call_operand.hbm [shape: f32[8,32], index: 9, kind: output, shape index: {1}]
  %10 = xla_tuple %s8, %s9
  %s11 = sld [smem:[#allocation0]]
  $region57: #{tpu_custom_call.1} parent=0
    _
  %s13 = ssub.s32 1, %s11
  %s14 = scalar_select 0, %s13, %s11
  %15 = sst [smem:[#allocation3]] %s0
  %16 = sst [smem:[#allocation4]] %s1
  $region1: #{tpu_custom_call.1} parent=0
    #allocation5 [shape = 'u8[4096]{0}', space=vmem, size = 0x1000, scoped, tag = 'output window, operand 0, single buffered']
    #allocation6 [shape = 's32[1]{0}', space=sflag, size = 0x4, scoped, tag = 'scoped memory for tpu_custom_call.1']
    #allocation7 [shape = 'u8[4096]{0}', space=vmem, size = 0x1000, scoped, tag = 'output window, operand 1, single buffered']
    #allocation8 [shape = 's32[1]{0}', space=sflag, size = 0x4, scoped, tag = 'scoped memory for tpu_custom_call.1']
    %17 = vsyncpa [#allocation6], 0
    %18 = vsyncpa [#allocation8], 0
    // Predicated region
    $region2: #{tpu_custom_call.1} parent=1 // pred_check
      _
    $region3: #{tpu_custom_call.1} parent=1 // pred_check_branch
      %20 = sbr.rel (0) target = $region5
    $region4: #{tpu_custom_call.1} parent=1 // pred_region
      _
    $region5: #{tpu_custom_call.1} parent=1 // pred_fallthru
      _
    // Predicated region
    $region6: #{tpu_custom_call.1} parent=1 // pred_check
      _
    $region7: #{tpu_custom_call.1} parent=1 // pred_check_branch
      %22 = sbr.rel (0) target = $region9
    $region8: #{tpu_custom_call.1} parent=1 // pred_region
      _
    $region9: #{tpu_custom_call.1} parent=1 // pred_fallthru
      _
    // Predicated region
    $region10: #{tpu_custom_call.1} parent=1 // pred_check
      _
    $region11: #{tpu_custom_call.1} parent=1 // pred_check_branch
      %24 = sbr.rel (0) target = $region13
    $region12: #{tpu_custom_call.1} parent=1 // pred_region
      _
    $region13: #{tpu_custom_call.1} parent=1 // pred_fallthru
      _
    // Predicated region
    $region14: #{tpu_custom_call.1} parent=1 // pred_check
      _
    $region15: #{tpu_custom_call.1} parent=1 // pred_check_branch
      %26 = sbr.rel (0) target = $region17
    $region16: #{tpu_custom_call.1} parent=1 // pred_region
      _
    $region17: #{tpu_custom_call.1} parent=1 // pred_fallthru
      _
    // Predicated region
    $region18: #{tpu_custom_call.1} parent=1 // pred_check
      _
    $region19: #{tpu_custom_call.1} parent=1 // pred_check_branch
      %28 = sbr.rel (0) target = $region21
    $region20: #{tpu_custom_call.1} parent=1 // pred_region
      _
    $region21: #{tpu_custom_call.1} parent=1 // pred_fallthru
      _
    // Predicated region
    $region22: #{tpu_custom_call.1} parent=1 // pred_check
      _
    $region23: #{tpu_custom_call.1} parent=1 // pred_check_branch
      %30 = sbr.rel (0) target = $region25
    $region24: #{tpu_custom_call.1} parent=1 // pred_region
      _
    $region25: #{tpu_custom_call.1} parent=1 // pred_fallthru
      _
    %s31 = sld [smem:[#allocation3]]
    %s32 = sld [smem:[#allocation4]]
    %s33 = sadd.s32 %s32, 1
    %v34 = vlaneseq
    %v35 = vshrl.u32 %v34, 7
    %v36 = vld [vmem:[%s2] sm:$0xff]
    %v37 = vld [vmem:[%s2 + $0x8] sm:$0xff]
    %v38 = vld [vmem:[%s3] sm:$0xff]
    %v39 = vld [vmem:[%s3 + $0x8] sm:$0xff]
    %p40 = scmp.eq.s32.totalorder 0, 0
    // Predicated region
    $region26: #{tpu_custom_call.1} parent=1 // pred_check
      %p41 = pneg %p40
    $region27: #{tpu_custom_call.1} parent=1 // pred_check_branch
      %43 = sbr.rel (%p41) target = $region29
    $region28: #{tpu_custom_call.1} parent=1 // pred_region
      %vm44 = vcmask 261120
      %45 = vst.msk [vmem:[#allocation5] sm:$0xff] %vm44, 0.0
      %46 = vst.msk [vmem:[#allocation7] sm:$0xff] %vm44, 0.0
    $region29: #{tpu_custom_call.1} parent=1 // pred_fallthru
      _
    // While loop
    $region30: #{tpu_custom_call.1} parent=1 // loop_pre_header
      _
    $region31: #{tpu_custom_call.1} parent=1 // loop_header
      %s48 = sphi %s31, %s50
      %p49 = scmp.ge.s32.totalorder %s48, %s33
      %v53 = vphi 0.0, %v93
      %v54 = vphi 0.0, %v95
    $region32: #{tpu_custom_call.1} parent=1 // loop_header_branch
      %52 = sbr.rel (%p49) target = $region36
    $region33: #{tpu_custom_call.1} parent=1 // loop_body
      %v55 = vstv %s48
      %vm56 = vcmp.eq.s32.totalorder %v38, %v55
      %vm57 = vcmp.eq.s32.totalorder %v39, %v55
      %v58 = vsel %vm56, 1, 0
      %v59 = vsel %vm57, 1, 0
      %60 = vset.pattern.permute.xlu0 0
      %61 = vperm.xlu0 %60, %v58
      %v62 = vpop.permute.xlu0 %61
      %63 = vset.pattern.permute.xlu0 0
      %64 = vperm.xlu0 %63, %v59
      %v65 = vpop.permute.xlu0 %64
      %vm66 = vcmp.eq.s32.totalorder %v62, 1
      %vm67 = vcmp.eq.s32.totalorder %v65, 1
      %v68 = vsel %vm66, %v36, 0.0
      %v69 = vsel %vm67, %v37, 0.0
      %vm70 = vcmask 261120
      %v71 = vsel %vm70, %v68, 0.0
      %v72 = vsel %vm70, %v69, 0.0
      %v73 = vadd.f32 %v71, %v72
      %v74 = vrot.slane %v73, 4
      %v75 = vadd.f32 %v73, %v74
      %v76 = vrot.slane %v75, 2
      %v77 = vadd.f32 %v75, %v76
      %v78 = vrot.slane %v77, 1
      %v79 = vadd.f32 %v77, %v78
      %v80 = vmul.f32 %v68, %v68
      %v81 = vmul.f32 %v69, %v69
      %v82 = vsel %vm70, %v80, 0.0
      %v83 = vsel %vm70, %v81, 0.0
      %v84 = vadd.f32 %v82, %v83
      %v85 = vrot.slane %v84, 4
      %v86 = vadd.f32 %v84, %v85
      %v87 = vrot.slane %v86, 2
      %v88 = vadd.f32 %v86, %v87
      %v89 = vrot.slane %v88, 1
      %v90 = vadd.f32 %v88, %v89
      %vm91 = vcmp.eq.s32.totalorder %v35, %v55
      %v92 = vsel %vm91, %v79, 0.0
      %v93 = vadd.f32 %v53, %v92
      %v94 = vsel %vm91, %v90, 0.0
      %v95 = vadd.f32 %v54, %v94
    $region34: #{tpu_custom_call.1} parent=1 // loop_footer
      %s50 = sadd.s32 %s48, 1
    $region35: #{tpu_custom_call.1} parent=1 // loop_footer_branch
      %47 = sbr.rel target = $region31
    $region36: #{tpu_custom_call.1} parent=1 // loop_exit
      _
    %v96 = vld [vmem:[#allocation5] sm:$0xff]
    %v97 = vadd.f32 %v96, %v53
    %vm98 = vcmask 261120
    %99 = vst.msk [vmem:[#allocation5] sm:$0xff] %vm98, %v97
    %v100 = vld [vmem:[#allocation7] sm:$0xff]
    %v101 = vadd.f32 %v100, %v54
    %102 = vst.msk [vmem:[#allocation7] sm:$0xff] %vm98, %v101
    // Predicated region
    $region37: #{tpu_custom_call.1} parent=1 // pred_check
      %p103 = pneg %p40
    $region38: #{tpu_custom_call.1} parent=1 // pred_check_branch
      %105 = sbr.rel (%p103) target = $region40
    $region39: #{tpu_custom_call.1} parent=1 // pred_region
      %v106 = vld [vmem:[%s4] sm:$0xff]
      %v107 = vld [vmem:[%s7] sm:$0x1]
      %v108 = vld [vmem:[#allocation5] sm:$0xff]
      %110 = vset.pattern.permute.xlu0 0
      %111 = vperm.xlu0 %110, %v106
      %v112 = vpop.permute.xlu0 %111
      %v114 = vmul.f32 %v108, %v112
      %v115 = vld [vmem:[#allocation7] sm:$0xff]
      %v116 = vmul.f32 %v115, %v112
      %v117 = vmul.f32 %v114, %v114
      %v118 = vmul.f32 %v107, 2.0
      %v119 = vmul.f32 %v107, %v107
      %v120 = vsub.f32 %v118, %v119
      %v122 = vlaneseq
      %v123 = vshrl.u32 %v122, 7
      %v124 = vsub.s32 0, %v123
      %v125 = vrot.slane %v120, %v124
      %v127 = vmul.f32 %v117, %v125
      %v128 = vsub.f32 %v116, %v127
      %v129 = vmax.f32 %v128, 0.0
      %v130 = vld [vmem:[%s5] sm:$0x1]
      %v131 = vadd.f32 %v129, 1e-06
      %v132 = vrsqrt.pop %v131
      %v134 = vlaneseq
      %v135 = vshrl.u32 %v134, 7
      %v136 = vsub.s32 0, %v135
      %v137 = vrot.slane %v130, %v136
      %v139 = vmul.f32 %v137, %v132
      %v140 = vld [vmem:[%s6] sm:$0x1]
      %v142 = vlaneseq
      %v143 = vshrl.u32 %v142, 7
      %v144 = vsub.s32 0, %v143
      %v145 = vrot.slane %v107, %v144
      %v147 = vmul.f32 %v145, %v114
      %v148 = vmul.f32 %v147, %v139
      %v150 = vlaneseq
      %v151 = vshrl.u32 %v150, 7
      %v152 = vsub.s32 0, %v151
      %v153 = vrot.slane %v140, %v152
      %v155 = vsub.f32 %v153, %v148
      %156 = vst.msk [vmem:[#allocation5] sm:$0xff] %vm98, %v139
      %157 = vst.msk [vmem:[#allocation7] sm:$0xff] %vm98, %v155
    $region40: #{tpu_custom_call.1} parent=1 // pred_fallthru
      _
    // Predicated region
    $region41: #{tpu_custom_call.1} parent=1 // pred_check
      _
    $region42: #{tpu_custom_call.1} parent=1 // pred_check_branch
      %159 = sbr.rel (0) target = $region44
    $region43: #{tpu_custom_call.1} parent=1 // pred_region
      %s161 = ssub.s32 128, 128
      %162 = vsyncadd [#allocation6], %s161
      %s164 = sshll.u32 [#allocation5], 4
      %s165 = int_to_ptr.vmem [resolvable:$true] %s164
      %167 = dma.vmem_to_hbm [thread:$0]  %s165, 128, %s8, [#allocation6]
    $region44: #{tpu_custom_call.1} parent=1 // pred_fallthru
      _
    // Predicated region
    $region45: #{tpu_custom_call.1} parent=1 // pred_check
      _
    $region46: #{tpu_custom_call.1} parent=1 // pred_check_branch
      %169 = sbr.rel (0) target = $region48
    $region47: #{tpu_custom_call.1} parent=1 // pred_region
      %s171 = ssub.s32 128, 128
      %172 = vsyncadd [#allocation8], %s171
      %s174 = sshll.u32 [#allocation7], 4
      %s175 = int_to_ptr.vmem [resolvable:$true] %s174
      %177 = dma.vmem_to_hbm [thread:$0]  %s175, 128, %s9, [#allocation8]
    $region48: #{tpu_custom_call.1} parent=1 // pred_fallthru
      _
    // Predicated region
    $region49: #{tpu_custom_call.1} parent=1 // pred_check
      _
    $region50: #{tpu_custom_call.1} parent=1 // pred_check_branch
      %179 = sbr.rel (0) target = $region52
    $region51: #{tpu_custom_call.1} parent=1 // pred_region
      %180 = dma.done [#allocation6], 128
    $region52: #{tpu_custom_call.1} parent=1 // pred_fallthru
      _
    // Predicated region
    $region53: #{tpu_custom_call.1} parent=1 // pred_check
      _
    $region54: #{tpu_custom_call.1} parent=1 // pred_check_branch
      %182 = sbr.rel (0) target = $region56
    $region55: #{tpu_custom_call.1} parent=1 // pred_region
      %183 = dma.done [#allocation8], 128
    $region56: #{tpu_custom_call.1} parent=1 // pred_fallthru
      _
    %184 = vsyncpa [#allocation6], 1
    %185 = vsyncpa [#allocation8], 1

</llo_original>
